<compile_context>
chip_gen: v5e
topology: v5e:2x2
jax: 0.10.0
libtpu: 0.0.40
codegen_flags: <defaults>
</compile_context>

<pallas_src>
import functools
import math

import jax
import jax.numpy as jnp
import numpy as np
from jax.experimental import pallas as pl
from jax.experimental.pallas import tpu as pltpu

GATING_DIM = 128


def _gating_kernel(x_ref, g_ref, wx_ref, gs_ref, o_ref):
    """One (TM, C) row-tile of the gated blend.

    x_ref : (TM, C) streamed rows of x, native dtype
    g_ref : (TM, C) resident mean-image rows, native dtype (same block every step)
    wx_ref: (C, 1)  resident W[:, :C]^T, native dtype
    gs_ref: (TM, 1) resident f32 column: g_mean @ W[:, C:]^T + b for each row's batch

    NOTE (ragged last block): overhang rows of x_ref hold unspecified VMEM data;
    they flow through sigmoid/blend but Pallas masks them on writeback.  Do not add
    tile-wide reductions here without masking those rows first.
    """
    x = x_ref[...]
    g = g_ref[...]
    # Gate score: only the x branch needs the MXU per step; the g branch is
    # loop-invariant and precomputed in the wrapper (gs_ref).  f32 accumulate.
    s = jnp.dot(x, wx_ref[...], preferred_element_type=jnp.float32) + gs_ref[...]
    gate = jax.nn.sigmoid(s).astype(x.dtype)               # (TM, 1), EUP
    # gate*x + (1-gate)*g  ==  g + gate*(x - g), all in native dtype.
    o_ref[...] = (g + gate * (x - g)).astype(o_ref.dtype)


def _resident_spec(block_shape, index_map):
    """BlockSpec for a grid-invariant operand: single-buffered if supported."""
    try:
        return pl.BlockSpec(block_shape, index_map, pipeline_mode=pl.Buffered(1))
    except TypeError:  # older BlockSpec without pipeline_mode — harmless fallback
        return pl.BlockSpec(block_shape, index_map)


@functools.partial(jax.jit, static_argnames=("tile_m",))
def gating_mechanism(x, grid_img_features, weight, bias, *, tile_m=None):
    """x: (T, B, C); grid_img_features: (S, B, C); weight: (1, 2C); bias: (1,)."""
    T, B, C = x.shape
    assert C == GATING_DIM

    n = T * B
    itemsize = jnp.dtype(x.dtype).itemsize
    sublane = max(8, 32 // itemsize)                  # 8 for f32, 16 for bf16
    step = (sublane * B) // math.gcd(sublane, B)      # rows align to B & sublane

    # Generation-aware VMEM budget (v5e/v6e: 128 MiB physical, v7x: 64 MiB per TC).
    try:
        vmem_cap = int(pltpu.get_tpu_info().vmem_capacity_bytes)
    except Exception:
        vmem_cap = 64 * 1024 * 1024                   # conservative fallback
    budget = (vmem_cap * 3) // 8                      # tile budget, >50% headroom

    # Planned bytes per tile row: x + out double-buffered (native dtype), g tile and
    # the (TM, 1) f32 gate-score column single-buffered (lane dim pads to 128).
    bytes_per_row = C * itemsize * (2 + 2 + 1) + 128 * 4
    fixed = 1 << 20                                   # wx + misc scratch allowance
    max_tm = max(step, ((budget - fixed) // bytes_per_row) // step * step)
    # TODO(synk): for very large, sublane-coprime B the clamp to `step` can exceed
    # the planned budget; vmem_limit_bytes below is sized from actual usage so the
    # kernel still compiles whenever it physically fits.

    if tile_m is None:
        tm_req = max_tm                               # default: biggest legal tile
    else:
        tm_req = min(max(step, (tile_m // step) * step), max_tm)
    tm = n if n <= tm_req else tm_req                 # single full-extent block for small n
    assert tm % B == 0

    x_flat = x.reshape(n, C)                          # free row-major reshape

    # TODO(synk): the tiny (S,B,C)->(B,C) mean over regions stays in plain JAX.
    g_mean = jnp.mean(grid_img_features.astype(jnp.float32), axis=0)     # (B, C) f32

    wx = weight[0, :C].reshape(C, 1).astype(x.dtype)                      # (C, 1)
    wg = weight[0, C:].reshape(C, 1).astype(jnp.float32)                  # (C, 1)
    # Loop-invariant g branch of the gate score, per batch (hoisted out of kernel).
    gscore_b = (jnp.dot(g_mean, wg, precision=jax.lax.Precision.HIGHEST)
                + bias.reshape(1, 1).astype(jnp.float32))                 # (B, 1) f32

    # Resident operands: per-batch values replicated over ONE tile only
    # (tm % B == 0, so row r of any block maps to batch r % B); the full (T*B, C)
    # broadcast is never materialized.  Constant index_map keeps them in VMEM.
    reps = tm // B
    g_tile = jnp.tile(g_mean.astype(x.dtype), (reps, 1))                  # (tm, C)
    gscore = jnp.tile(gscore_b, (reps, 1))                                # (tm, 1) f32

    grid = (pl.cdiv(n, tm),)

    # Worst-case VMEM (everything double-buffered) so the explicit limit is safe
    # even if pipeline_mode is a no-op; overrides v5e's small 16 MiB scoped default.
    worst = 2 * tm * (3 * C * itemsize + 128 * 4) + fixed
    vmem_limit = int(min(vmem_cap - (4 << 20), max(worst + (8 << 20), 32 << 20)))

    out_flat = pl.pallas_call(
        _gating_kernel,
        out_shape=jax.ShapeDtypeStruct((n, C), x.dtype),
        grid_spec=pltpu.PrefetchScalarGridSpec(
            num_scalar_prefetch=0,
            grid=grid,
            in_specs=[
                pl.BlockSpec((tm, C), lambda i: (i, 0)),        # x rows (streamed)
                _resident_spec((tm, C), lambda i: (0, 0)),      # g tile (resident)
                _resident_spec((C, 1), lambda i: (0, 0)),       # W[:, :C]^T (resident)
                _resident_spec((tm, 1), lambda i: (0, 0)),      # g gate score (resident)
            ],
            out_specs=pl.BlockSpec((tm, C), lambda i: (i, 0)),  # lane-dense (C=128)
        ),
        compiler_params=pltpu.CompilerParams(
            dimension_semantics=("parallel",),        # v7x megacore shards row grid
            vmem_limit_bytes=vmem_limit,
        ),
    )(x_flat, g_tile, wx, gscore)

    return out_flat.reshape(T, B, C)


def _reference(x, grid_img_features, weight, bias):
    g = jnp.mean(grid_img_features, axis=0, keepdims=True)     # (1, B, C)
    T, B, C = x.shape
    g = jnp.broadcast_to(g, (T, B, C))
    merge = jnp.concatenate([x, g], axis=-1)                   # (T, B, 2C)
    gate = jax.nn.sigmoid(merge @ weight.T + bias)             # (T, B, 1)
    return gate * x + (1.0 - gate) * g


if __name__ == "__main__":
    key = jax.random.PRNGKey(0)
    k_x, k_g, k_w, k_x2 = jax.random.split(key, 4)

    T, B, C, S = 8, 2, GATING_DIM, 4
    x = jax.random.normal(k_x, (T, B, C), dtype=jnp.float32)
    grid_img_features = jax.random.normal(k_g, (S, B, C), dtype=jnp.float32)

    # Deterministic parameter init matching nn.Linear(2C, 1) + xavier_uniform_.
    fan_in, fan_out = 2 * C, 1
    bound = float(np.sqrt(6.0 / (fan_in + fan_out)))
    weight = jax.random.uniform(k_w, (1, 2 * C), minval=-bound, maxval=bound,
                                dtype=jnp.float32)
    bias = jnp.zeros((1,), dtype=jnp.float32)

    # 1) Default path: single full-extent block, auto tile size.
    out = jax.block_until_ready(gating_mechanism(x, grid_img_features, weight, bias))
    ref = _reference(x, grid_img_features, weight, bias)
    np.testing.assert_allclose(np.asarray(out), np.asarray(ref),
                               rtol=1e-5, atol=1e-5)

    # 2) Multi-block + ragged last block path (T*B = 18 rows, 8-row tiles).
    x2 = jax.random.normal(k_x2, (9, B, C), dtype=jnp.float32)
    out2 = jax.block_until_ready(
        gating_mechanism(x2, grid_img_features, weight, bias, tile_m=8))
    ref2 = _reference(x2, grid_img_features, weight, bias)
    np.testing.assert_allclose(np.asarray(out2), np.asarray(ref2),
                               rtol=1e-5, atol=1e-5)

    print("KERNEL_OK")
</pallas_src>

<mosaic_0001>
module attributes {stable_mosaic.version = 11 : i64} {
  func.func @_gating_kernel(%arg0: i32, %arg1: memref<16x128xf32, #tpu.memory_space<vmem>>, %arg2: memref<16x128xf32, #tpu.memory_space<vmem>>, %arg3: memref<128x1xf32, #tpu.memory_space<vmem>>, %arg4: memref<16x1xf32, #tpu.memory_space<vmem>>, %arg5: memref<16x128xf32, #tpu.memory_space<vmem>>) attributes {dimension_semantics = [#tpu.dimension_semantics<parallel>], iteration_bounds = array<i64: 1>, scalar_prefetch = 0 : i64, scratch_operands = 0 : i64, tpu.core_type = #tpu.core_type<tc>, window_params = [{transform_indices = @transform_0, window_bounds = array<i64: 16, 128>}, {pipeline_mode = #tpu.pipeline_mode<synchronous>, transform_indices = @transform_1, window_bounds = array<i64: 16, 128>}, {pipeline_mode = #tpu.pipeline_mode<synchronous>, transform_indices = @transform_2, window_bounds = array<i64: 128, 1>}, {pipeline_mode = #tpu.pipeline_mode<synchronous>, transform_indices = @transform_3, window_bounds = array<i64: 16, 1>}, {transform_indices = @transform_4, window_bounds = array<i64: 16, 128>}]} {
    %c0 = arith.constant 0 : index
    %c0_0 = arith.constant 0 : index
    %0 = vector.load %arg1[%c0, %c0_0] : memref<16x128xf32, #tpu.memory_space<vmem>>, vector<16x128xf32>
    %c0_1 = arith.constant 0 : index
    %c0_2 = arith.constant 0 : index
    %1 = vector.load %arg2[%c0_1, %c0_2] : memref<16x128xf32, #tpu.memory_space<vmem>>, vector<16x128xf32>
    %c0_3 = arith.constant 0 : index
    %c0_4 = arith.constant 0 : index
    %2 = vector.load %arg3[%c0_3, %c0_4] : memref<128x1xf32, #tpu.memory_space<vmem>>, vector<128x1xf32>
    %cst = arith.constant dense<0.000000e+00> : vector<16x1xf32>
    %3 = tpu.matmul %0, %2, %cst {dimension_numbers = #tpu.dot_dimension_numbers<[1], [0], [0], [1], [0, 0, 1, 1], [], []>} : vector<16x128xf32>, vector<128x1xf32>, vector<16x1xf32> -> vector<16x1xf32>
    %c0_5 = arith.constant 0 : index
    %c0_6 = arith.constant 0 : index
    %4 = vector.load %arg4[%c0_5, %c0_6] : memref<16x1xf32, #tpu.memory_space<vmem>>, vector<16x1xf32>
    %5 = arith.addf %3, %4 : vector<16x1xf32>
    %6 = arith.negf %5 : vector<16x1xf32>
    %7 = math.exp %6 : vector<16x1xf32>
    %cst_7 = arith.constant 1.000000e+00 : f32
    %8 = vector.broadcast %cst_7 : f32 to vector<16x1xf32>
    %9 = arith.addf %8, %7 : vector<16x1xf32>
    %10 = arith.divf %8, %9 : vector<16x1xf32>
    %11 = arith.subf %0, %1 : vector<16x128xf32>
    %12 = vector.broadcast %10 : vector<16x1xf32> to vector<16x128xf32>
    %13 = arith.mulf %12, %11 : vector<16x128xf32>
    %14 = arith.addf %1, %13 : vector<16x128xf32>
    %c0_8 = arith.constant 0 : index
    %c0_9 = arith.constant 0 : index
    %15 = vector.load %arg5[%c0_8, %c0_9] : memref<16x128xf32, #tpu.memory_space<vmem>>, vector<16x128xf32>
    tpu.vector_store %arg5[%c0_8, %c0_9], %14 {strides = array<i32>} : memref<16x128xf32, #tpu.memory_space<vmem>>, vector<16x128xf32>,
    return
  }
  func.func @transform_0(%arg0: i32) -> (i32, i32) {
    %c0_i32 = arith.constant 0 : i32
    %c0_i32_0 = arith.constant 0 : i32
    return %arg0, %c0_i32 : i32, i32
  }
  func.func @transform_1(%arg0: i32) -> (i32, i32) {
    %c0_i32 = arith.constant 0 : i32
    %c0_i32_0 = arith.constant 0 : i32
    %c0_i32_1 = arith.constant 0 : i32
    return %c0_i32, %c0_i32_0 : i32, i32
  }
  func.func @transform_2(%arg0: i32) -> (i32, i32) {
    %c0_i32 = arith.constant 0 : i32
    %c0_i32_0 = arith.constant 0 : i32
    %c0_i32_1 = arith.constant 0 : i32
    return %c0_i32, %c0_i32_0 : i32, i32
  }
  func.func @transform_3(%arg0: i32) -> (i32, i32) {
    %c0_i32 = arith.constant 0 : i32
    %c0_i32_0 = arith.constant 0 : i32
    %c0_i32_1 = arith.constant 0 : i32
    return %c0_i32, %c0_i32_0 : i32, i32
  }
  func.func @transform_4(%arg0: i32) -> (i32, i32) {
    %c0_i32 = arith.constant 0 : i32
    %c0_i32_0 = arith.constant 0 : i32
    return %arg0, %c0_i32 : i32, i32
  }
}

</mosaic_0001>

<llo_original>
// kernel: gating_mechanism.1
$region0: #{gating_mechanism.1}
  #allocation0 [shape = 'u32[]', space=smem, size = 0x4, offset = 0x4, fixed_abs, tag = 'smem constant byte address 0x4 - core index']
  #allocation1 [shape = 'u32[72,128]{1,0:T(1,128)}', space=vmem, size = 0x9000, scoped, tag = 'internal scratch']
  %s0 = inlined_call_operand.vmem [shape: f32[16,128], index: 0, kind: input, shape index: {}]
  %s1 = inlined_call_operand.vmem [shape: f32[16,128], index: 1, kind: input, shape index: {}]
  %s2 = inlined_call_operand.vmem [shape: f32[128,1], index: 2, kind: input, shape index: {}]
  %s3 = inlined_call_operand.vmem [shape: f32[16,1], index: 3, kind: input, shape index: {}]
  %s4 = inlined_call_operand.hbm [shape: f32[16,128], index: 4, kind: output, shape index: {}]
  %s5 = sld [smem:[#allocation0]]
  $region26: #{gating_mechanism.1} parent=0
    _
  %s7 = ssub.s32 1, %s5
  %s8 = scalar_select 0, %s7, %s5
  $region1: #{gating_mechanism.1} parent=0
    #allocation2 [shape = 'u8[8192]{0}', space=vmem, size = 0x2000, scoped, tag = 'output window, operand 0, single buffered']
    #allocation3 [shape = 's32[1]{0}', space=sflag, size = 0x4, scoped, tag = 'scoped memory for gating_mechanism.1']
    %9 = vsyncpa [#allocation3], 0
    // Predicated region
    $region2: #{gating_mechanism.1} parent=1 // pred_check
      _
    $region3: #{gating_mechanism.1} parent=1 // pred_check_branch
      %11 = sbr.rel (0) target = $region5
    $region4: #{gating_mechanism.1} parent=1 // pred_region
      _
    $region5: #{gating_mechanism.1} parent=1 // pred_fallthru
      _
    // Predicated region
    $region6: #{gating_mechanism.1} parent=1 // pred_check
      _
    $region7: #{gating_mechanism.1} parent=1 // pred_check_branch
      %13 = sbr.rel (0) target = $region9
    $region8: #{gating_mechanism.1} parent=1 // pred_region
      _
    $region9: #{gating_mechanism.1} parent=1 // pred_fallthru
      _
    // Predicated region
    $region10: #{gating_mechanism.1} parent=1 // pred_check
      _
    $region11: #{gating_mechanism.1} parent=1 // pred_check_branch
      %15 = sbr.rel (0) target = $region13
    $region12: #{gating_mechanism.1} parent=1 // pred_region
      _
    $region13: #{gating_mechanism.1} parent=1 // pred_fallthru
      _
    // Predicated region
    $region14: #{gating_mechanism.1} parent=1 // pred_check
      _
    $region15: #{gating_mechanism.1} parent=1 // pred_check_branch
      %17 = sbr.rel (0) target = $region17
    $region16: #{gating_mechanism.1} parent=1 // pred_region
      _
    $region17: #{gating_mechanism.1} parent=1 // pred_fallthru
      _
    %v18 = vld [vmem:[%s0] sm:$0xff]
    %v19 = vld [vmem:[%s0 + $0x8] sm:$0xff]
    %v20 = vld [vmem:[%s1] sm:$0xff]
    %v21 = vld [vmem:[%s1 + $0x8] sm:$0xff]
    %v22 = vld [vmem:[%s2] sm:$0xff]
    %v23 = vld [vmem:[%s2 + $0x8] sm:$0xff]
    %v24 = vld [vmem:[%s2 + $0x10] sm:$0xff]
    %v25 = vld [vmem:[%s2 + $0x18] sm:$0xff]
    %v26 = vld [vmem:[%s2 + $0x20] sm:$0xff]
    %v27 = vld [vmem:[%s2 + $0x28] sm:$0xff]
    %v28 = vld [vmem:[%s2 + $0x30] sm:$0xff]
    %v29 = vld [vmem:[%s2 + $0x38] sm:$0xff]
    %v30 = vld [vmem:[%s2 + $0x40] sm:$0xff]
    %v31 = vld [vmem:[%s2 + $0x48] sm:$0xff]
    %v32 = vld [vmem:[%s2 + $0x50] sm:$0xff]
    %v33 = vld [vmem:[%s2 + $0x58] sm:$0xff]
    %v34 = vld [vmem:[%s2 + $0x60] sm:$0xff]
    %v35 = vld [vmem:[%s2 + $0x68] sm:$0xff]
    %v36 = vld [vmem:[%s2 + $0x70] sm:$0xff]
    %v37 = vld [vmem:[%s2 + $0x78] sm:$0xff]
    %v38 = vld [vmem:[%s3] sm:$0xff]
    %v39 = vld [vmem:[%s3 + $0x8] sm:$0xff]
    %40 = vmatpush.msra.mxu0 %v37
    %41 = vmatpush.msra.mxu0 %v36
    %42 = vmatpush.msra.mxu0 %v35
    %43 = vmatpush.msra.mxu0 %v34
    %44 = vmatpush.msra.mxu0 %v33
    %45 = vmatpush.msra.mxu0 %v32
    %46 = vmatpush.msra.mxu0 %v31
    %47 = vmatpush.msra.mxu0 %v30
    %48 = vmatpush.msra.mxu0 %v29
    %49 = vmatpush.msra.mxu0 %v28
    %50 = vmatpush.msra.mxu0 %v27
    %51 = vmatpush.msra.mxu0 %v26
    %52 = vmatpush.msra.mxu0 %v25
    %53 = vmatpush.msra.mxu0 %v24
    %54 = vmatpush.msra.mxu0 %v23
    %55 = vmatpush.msra.mxu0 %v22
    %56 = vmatmul.f32.gmra.mxu0 %v18
    %v57 = vpop.f32.mrf.mxu0
    %v58 = vadd.f32 %v38, %v57
    %59 = vmatmul.f32.gmra.mxu0 %v19
    %v60 = vpop.f32.mrf.mxu0
    %v61 = vadd.f32 %v39, %v60
    %62 = vdwg.mxu0
    %v63 = vxor.u32 %v58, 2147483648
    %v64 = vxor.u32 %v61, 2147483648
    %v65 = vmul.f32 %v63, 1.442695
    %v66 = vpow.pop %v65
    %v67 = vmul.f32 %v64, 1.442695
    %v68 = vpow.pop %v67
    %v69 = vadd.f32 %v66, 1.0
    %v70 = vadd.f32 %v68, 1.0
    %v71 = vrcp.pop %v69
    %v72 = vmul.f32 %v69, %v71
    %v73 = vsub.f32 1.0, %v72
    %v74 = vmul.f32 %v71, %v73
    %v75 = vadd.f32 %v71, %v74
    %vm76 = vweird.f32 %v69
    %vm77 = vweird.f32 %v71
    %vm78 = vmor %vm76, %vm77
    %v79 = vsel %vm78, %v71, %v75
    %v80 = vand.u32 2147483647, %v69
    %vm81 = vcmp.eq.f32.partialorder %v80, 8.507059e+37
    %v82 = vand.u32 %v69, 2147483648
    %v83 = vor.u32 1.1754944e-38, %v82
    %v84 = vsel %vm81, %v83, %v79
    %v85 = vmul.f32 1.0, %v84
    %v86 = vrcp.pop %v70
    %v87 = vmul.f32 %v70, %v86
    %v88 = vsub.f32 1.0, %v87
    %v89 = vmul.f32 %v86, %v88
    %v90 = vadd.f32 %v86, %v89
    %vm91 = vweird.f32 %v70
    %vm92 = vweird.f32 %v86
    %vm93 = vmor %vm91, %vm92
    %v94 = vsel %vm93, %v86, %v90
    %v95 = vand.u32 2147483647, %v70
    %vm96 = vcmp.eq.f32.partialorder %v95, 8.507059e+37
    %v97 = vand.u32 %v70, 2147483648
    %v98 = vor.u32 1.1754944e-38, %v97
    %v99 = vsel %vm96, %v98, %v94
    %v100 = vmul.f32 1.0, %v99
    %v101 = vsub.f32 %v18, %v20
    %v102 = vsub.f32 %v19, %v21
    %104 = vset.pattern.permute.xlu0 0
    %105 = vperm.xlu0 %104, %v85
    %v106 = vpop.permute.xlu0 %105
    %109 = vset.pattern.permute.xlu0 0
    %110 = vperm.xlu0 %109, %v100
    %v111 = vpop.permute.xlu0 %110
    %v113 = vmul.f32 %v106, %v101
    %v114 = vmul.f32 %v111, %v102
    %v115 = vadd.f32 %v20, %v113
    %v116 = vadd.f32 %v21, %v114
    %117 = vst [vmem:[#allocation2] sm:$0xff] %v115
    %118 = vst [vmem:[#allocation2 + $0x8] sm:$0xff] %v116
    // Predicated region
    $region18: #{gating_mechanism.1} parent=1 // pred_check
      _
    $region19: #{gating_mechanism.1} parent=1 // pred_check_branch
      %120 = sbr.rel (0) target = $region21
    $region20: #{gating_mechanism.1} parent=1 // pred_region
      %122 = vsyncadd [#allocation3], 0
      %s123 = sshll.u32 [#allocation2], 4
      %s124 = int_to_ptr.vmem [resolvable:$true] %s123
      %s125 = sshll.u32 %s4, 4
      %s126 = int_to_ptr.hbm [resolvable:$true] %s125
      %131 = dma.vmem_to_hbm [thread:$0]  %s124, 256, %s126, [#allocation3], 128, 128, 8
    $region21: #{gating_mechanism.1} parent=1 // pred_fallthru
      _
    // Predicated region
    $region22: #{gating_mechanism.1} parent=1 // pred_check
      _
    $region23: #{gating_mechanism.1} parent=1 // pred_check_branch
      %133 = sbr.rel (0) target = $region25
    $region24: #{gating_mechanism.1} parent=1 // pred_region
      %135 = dma.done [#allocation3], 256
    $region25: #{gating_mechanism.1} parent=1 // pred_fallthru
      _
    %136 = vsyncpa [#allocation3], 1

</llo_original>
